<compile_context>
chip_gen: v7x
topology: tpu7x:2x2x1
jax: 0.10.0
libtpu: 0.0.40
codegen_flags: <defaults>
</compile_context>

<pallas_src>
import functools

import jax
import jax.numpy as jnp
from jax import lax
from jax.experimental import pallas as pl
from jax.experimental.pallas import tpu as pltpu

LANE = 128
SUBLANE = 8
TILE = SUBLANE * LANE          # 1024 elements; wrapper pads flat input to this
MAX_BLOCK_ROWS = 2048          # 2048 x 128 f32 = 1 MiB per input block


def _dice_bce_kernel(x_ref, t_ref, acc_ref, *, n_valid, block_rows, need_mask):
    """Accumulate four partial sums into acc_ref (shape (4, 8, 128)).

    acc[0] = sum(p * t)      (intersection)
    acc[1] = sum(p)
    acc[2] = sum(t)
    acc[3] = sum(elementwise BCE)   (mean taken in the wrapper)
    """
    block_elems = block_rows * LANE
    i = pl.program_id(0)

    @pl.when(i == 0)
    def _init():
        acc_ref[...] = jnp.zeros_like(acc_ref)

    x = x_ref[...].astype(jnp.float32)
    t = t_ref[...].astype(jnp.float32)

    # sigmoid via tanh (1 EUP op), stable logits-space BCE (1 more EUP op).
    p = 0.5 * jnp.tanh(0.5 * x) + 0.5            # sigmoid(x)
    s_abs = jnp.where(x >= 0.0, p, 1.0 - p)      # sigmoid(|x|) in [0.5, 1)
    bce = jnp.maximum(x, 0.0) - x * t - jnp.log(s_abs)

    if need_mask:
        # Mask out lane-padding / over-covered tail elements (select -> any
        # garbage in the out-of-range region cannot contaminate the sums).
        rem = n_valid - i * block_elems
        idx = (lax.broadcasted_iota(jnp.int32, (block_rows, LANE), 0) * LANE
               + lax.broadcasted_iota(jnp.int32, (block_rows, LANE), 1))
        mask = idx < rem
        zero = jnp.float32(0.0)
        p = jnp.where(mask, p, zero)
        t = jnp.where(mask, t, zero)
        bce = jnp.where(mask, bce, zero)

    def fold(v):
        # block_rows is always a multiple of 8: layout-preserving reshape,
        # axis-0 reduce is pure VPU vreg adds.
        return jnp.sum(v.reshape(-1, SUBLANE, LANE), axis=0)

    acc_ref[0] += fold(p * t)
    acc_ref[1] += fold(p)
    acc_ref[2] += fold(t)
    acc_ref[3] += fold(bce)


def dice_bce_loss(inputs, targets, smooth=1.0):
    """JAX/Pallas equivalent of DiceBCELoss.forward(inputs, targets, smooth)."""
    n = inputs.size
    x = inputs.reshape(-1)      # keep native dtype; cast happens in-kernel
    t = targets.reshape(-1)

    # Pad only when N is not (8*128)-aligned (<= 1023 elements of padding).
    pad = (-n) % TILE
    if pad:
        x = jnp.pad(x, (0, pad))
        t = jnp.pad(t, (0, pad))
    rows = (n + pad) // LANE                      # always a multiple of 8

    block_rows = min(rows, MAX_BLOCK_ROWS)        # always a multiple of 8
    num_blocks = pl.cdiv(rows, block_rows)
    # Mask only needed when the grid covers more elements than actually exist.
    need_mask = (num_blocks * block_rows * LANE) != n

    xr = x.reshape(rows, LANE)
    tr = t.reshape(rows, LANE)

    kernel = functools.partial(
        _dice_bce_kernel,
        n_valid=n,
        block_rows=block_rows,
        need_mask=need_mask,
    )

    in_spec = pl.BlockSpec((block_rows, LANE), lambda i: (i, 0))
    acc = pl.pallas_call(
        kernel,
        out_shape=jax.ShapeDtypeStruct((4, SUBLANE, LANE), jnp.float32),
        grid_spec=pltpu.PrefetchScalarGridSpec(
            num_scalar_prefetch=0,
            grid=(num_blocks,),
            in_specs=[in_spec, in_spec],
            out_specs=pl.BlockSpec((4, SUBLANE, LANE), lambda i: (0, 0, 0)),
        ),
        compiler_params=pltpu.CompilerParams(
            dimension_semantics=("arbitrary",)),
    )(xr, tr)

    sums = jnp.sum(acc, axis=(1, 2))
    intersection, p_sum, t_sum, bce_sum = sums[0], sums[1], sums[2], sums[3]

    dice_loss = 1.0 - (2.0 * intersection + smooth) / (p_sum + t_sum + smooth)
    bce = bce_sum / jnp.float32(n)
    return bce + dice_loss


def _reference(inputs, targets, smooth=1.0):
    """Mirrors the PyTorch module (sigmoid -> clamped-log BCE mean + dice)."""
    p = jax.nn.sigmoid(inputs.reshape(-1).astype(jnp.float32))
    t = targets.reshape(-1).astype(jnp.float32)
    inter = jnp.sum(p * t)
    dice = 1.0 - (2.0 * inter + smooth) / (jnp.sum(p) + jnp.sum(t) + smooth)
    logp = jnp.maximum(jnp.log(p), -100.0)
    log1mp = jnp.maximum(jnp.log(1.0 - p), -100.0)
    bce = jnp.mean(-(t * logp + (1.0 - t) * log1mp))
    return bce + dice


if __name__ == "__main__":
    key = jax.random.PRNGKey(0)
    k1, k2, k3, k4 = jax.random.split(key, 4)

    # Lane-aligned case consistent with a segmentation logit map: [B, C, H, W]
    logits = jax.random.normal(k1, (2, 4, 16, 16), dtype=jnp.float32)
    targets = (jax.random.uniform(k2, (2, 4, 16, 16)) > 0.5).astype(jnp.float32)
    loss = jax.block_until_ready(dice_bce_loss(logits, targets, smooth=1.0))
    ref = _reference(logits, targets, smooth=1.0)
    assert jnp.allclose(loss, ref, rtol=1e-4, atol=1e-4), (loss, ref)

    # Small lane-unaligned case to exercise the in-kernel tail mask.
    logits2 = jax.random.normal(k3, (2, 3, 7, 11), dtype=jnp.float32)
    targets2 = (jax.random.uniform(k4, (2, 3, 7, 11)) > 0.5).astype(jnp.float32)
    loss2 = jax.block_until_ready(dice_bce_loss(logits2, targets2, smooth=1.0))
    ref2 = _reference(logits2, targets2, smooth=1.0)
    assert jnp.allclose(loss2, ref2, rtol=1e-4, atol=1e-4), (loss2, ref2)

    print("KERNEL_OK")
</pallas_src>

<mosaic_0001>
module attributes {stable_mosaic.version = 11 : i64} {
  func.func @_dice_bce_kernel(%arg0: i32, %arg1: memref<16x128xf32, #tpu.memory_space<vmem>>, %arg2: memref<16x128xf32, #tpu.memory_space<vmem>>, %arg3: memref<4x8x128xf32, #tpu.memory_space<vmem>>) attributes {dimension_semantics = [#tpu.dimension_semantics<arbitrary>], iteration_bounds = array<i64: 1>, scalar_prefetch = 0 : i64, scratch_operands = 0 : i64, tpu.core_type = #tpu.core_type<tc>, window_params = [{transform_indices = @transform_0, window_bounds = array<i64: 16, 128>}, {transform_indices = @transform_1, window_bounds = array<i64: 16, 128>}, {pipeline_mode = #tpu.pipeline_mode<synchronous>, transform_indices = @transform_2, window_bounds = array<i64: 4, 8, 128>}]} {
    %c0_i32 = arith.constant 0 : i32
    %0 = arith.cmpi eq, %arg0, %c0_i32 : i32
    %1 = arith.extui %0 : i1 to i32
    %c0_i32_0 = arith.constant 0 : i32
    %2 = arith.cmpi ne, %1, %c0_i32_0 : i32
    scf.if %2 {
      %cst_34 = arith.constant 0.000000e+00 : f32
      %56 = vector.broadcast %cst_34 : f32 to vector<4x8x128xf32>
      %c0_35 = arith.constant 0 : index
      %c0_36 = arith.constant 0 : index
      %c0_37 = arith.constant 0 : index
      %57 = vector.load %arg3[%c0_35, %c0_36, %c0_37] : memref<4x8x128xf32, #tpu.memory_space<vmem>>, vector<4x8x128xf32>
      tpu.vector_store %arg3[%c0_35, %c0_36, %c0_37], %56 {strides = array<i32>} : memref<4x8x128xf32, #tpu.memory_space<vmem>>, vector<4x8x128xf32>,
    } else {
    }
    %c0 = arith.constant 0 : index
    %c0_1 = arith.constant 0 : index
    %3 = vector.load %arg1[%c0, %c0_1] : memref<16x128xf32, #tpu.memory_space<vmem>>, vector<16x128xf32>
    %c0_2 = arith.constant 0 : index
    %c0_3 = arith.constant 0 : index
    %4 = vector.load %arg2[%c0_2, %c0_3] : memref<16x128xf32, #tpu.memory_space<vmem>>, vector<16x128xf32>
    %cst = arith.constant 5.000000e-01 : f32
    %5 = vector.broadcast %cst : f32 to vector<16x128xf32>
    %6 = arith.mulf %5, %3 : vector<16x128xf32>
    %7 = math.tanh %6 : vector<16x128xf32>
    %cst_4 = arith.constant 5.000000e-01 : f32
    %8 = vector.broadcast %cst_4 : f32 to vector<16x128xf32>
    %9 = arith.mulf %8, %7 : vector<16x128xf32>
    %cst_5 = arith.constant 5.000000e-01 : f32
    %10 = vector.broadcast %cst_5 : f32 to vector<16x128xf32>
    %11 = arith.addf %9, %10 : vector<16x128xf32>
    %cst_6 = arith.constant 0.000000e+00 : f32
    %12 = vector.broadcast %cst_6 : f32 to vector<16x128xf32>
    %13 = arith.cmpf oge, %3, %12 : vector<16x128xf32>
    %cst_7 = arith.constant 1.000000e+00 : f32
    %14 = vector.broadcast %cst_7 : f32 to vector<16x128xf32>
    %15 = arith.subf %14, %11 : vector<16x128xf32>
    %16 = arith.select %13, %11, %15 : vector<16x128xi1>, vector<16x128xf32>
    %cst_8 = arith.constant 0.000000e+00 : f32
    %17 = vector.broadcast %cst_8 : f32 to vector<16x128xf32>
    %18 = arith.maximumf %3, %17 : vector<16x128xf32>
    %19 = arith.mulf %3, %4 : vector<16x128xf32>
    %20 = arith.subf %18, %19 : vector<16x128xf32>
    %21 = math.log %16 : vector<16x128xf32>
    %22 = arith.subf %20, %21 : vector<16x128xf32>
    %c0_9 = arith.constant 0 : index
    %c0_10 = arith.constant 0 : index
    %c0_11 = arith.constant 0 : index
    %23 = vector.load %arg3[%c0_9, %c0_10, %c0_11] : memref<4x8x128xf32, #tpu.memory_space<vmem>>, vector<1x8x128xf32>
    %24 = vector.shape_cast %23 : vector<1x8x128xf32> to vector<8x128xf32>
    %25 = arith.mulf %11, %4 : vector<16x128xf32>
    %26 = vector.shape_cast %25 : vector<16x128xf32> to vector<2x8x128xf32>
    %cst_12 = arith.constant dense<0.000000e+00> : vector<8x128xf32>
    %27 = vector.multi_reduction <add>, %26, %cst_12 [0] : vector<2x8x128xf32> to vector<8x128xf32>
    %28 = arith.addf %24, %27 : vector<8x128xf32>
    %c0_13 = arith.constant 0 : index
    %c0_14 = arith.constant 0 : index
    %c0_15 = arith.constant 0 : index
    %29 = vector.load %arg3[%c0_13, %c0_14, %c0_15] : memref<4x8x128xf32, #tpu.memory_space<vmem>>, vector<1x8x128xf32>
    %30 = vector.shape_cast %29 : vector<1x8x128xf32> to vector<8x128xf32>
    %31 = vector.shape_cast %28 : vector<8x128xf32> to vector<1x8x128xf32>
    tpu.vector_store %arg3[%c0_13, %c0_14, %c0_15], %31 {strides = array<i32>} : memref<4x8x128xf32, #tpu.memory_space<vmem>>, vector<1x8x128xf32>,
    %c1 = arith.constant 1 : index
    %c0_16 = arith.constant 0 : index
    %c0_17 = arith.constant 0 : index
    %32 = vector.load %arg3[%c1, %c0_16, %c0_17] : memref<4x8x128xf32, #tpu.memory_space<vmem>>, vector<1x8x128xf32>
    %33 = vector.shape_cast %32 : vector<1x8x128xf32> to vector<8x128xf32>
    %34 = vector.shape_cast %11 : vector<16x128xf32> to vector<2x8x128xf32>
    %cst_18 = arith.constant dense<0.000000e+00> : vector<8x128xf32>
    %35 = vector.multi_reduction <add>, %34, %cst_18 [0] : vector<2x8x128xf32> to vector<8x128xf32>
    %36 = arith.addf %33, %35 : vector<8x128xf32>
    %c1_19 = arith.constant 1 : index
    %c0_20 = arith.constant 0 : index
    %c0_21 = arith.constant 0 : index
    %37 = vector.load %arg3[%c1_19, %c0_20, %c0_21] : memref<4x8x128xf32, #tpu.memory_space<vmem>>, vector<1x8x128xf32>
    %38 = vector.shape_cast %37 : vector<1x8x128xf32> to vector<8x128xf32>
    %39 = vector.shape_cast %36 : vector<8x128xf32> to vector<1x8x128xf32>
    tpu.vector_store %arg3[%c1_19, %c0_20, %c0_21], %39 {strides = array<i32>} : memref<4x8x128xf32, #tpu.memory_space<vmem>>, vector<1x8x128xf32>,
    %c2 = arith.constant 2 : index
    %c0_22 = arith.constant 0 : index
    %c0_23 = arith.constant 0 : index
    %40 = vector.load %arg3[%c2, %c0_22, %c0_23] : memref<4x8x128xf32, #tpu.memory_space<vmem>>, vector<1x8x128xf32>
    %41 = vector.shape_cast %40 : vector<1x8x128xf32> to vector<8x128xf32>
    %42 = vector.shape_cast %4 : vector<16x128xf32> to vector<2x8x128xf32>
    %cst_24 = arith.constant dense<0.000000e+00> : vector<8x128xf32>
    %43 = vector.multi_reduction <add>, %42, %cst_24 [0] : vector<2x8x128xf32> to vector<8x128xf32>
    %44 = arith.addf %41, %43 : vector<8x128xf32>
    %c2_25 = arith.constant 2 : index
    %c0_26 = arith.constant 0 : index
    %c0_27 = arith.constant 0 : index
    %45 = vector.load %arg3[%c2_25, %c0_26, %c0_27] : memref<4x8x128xf32, #tpu.memory_space<vmem>>, vector<1x8x128xf32>
    %46 = vector.shape_cast %45 : vector<1x8x128xf32> to vector<8x128xf32>
    %47 = vector.shape_cast %44 : vector<8x128xf32> to vector<1x8x128xf32>
    tpu.vector_store %arg3[%c2_25, %c0_26, %c0_27], %47 {strides = array<i32>} : memref<4x8x128xf32, #tpu.memory_space<vmem>>, vector<1x8x128xf32>,
    %c3 = arith.constant 3 : index
    %c0_28 = arith.constant 0 : index
    %c0_29 = arith.constant 0 : index
    %48 = vector.load %arg3[%c3, %c0_28, %c0_29] : memref<4x8x128xf32, #tpu.memory_space<vmem>>, vector<1x8x128xf32>
    %49 = vector.shape_cast %48 : vector<1x8x128xf32> to vector<8x128xf32>
    %50 = vector.shape_cast %22 : vector<16x128xf32> to vector<2x8x128xf32>
    %cst_30 = arith.constant dense<0.000000e+00> : vector<8x128xf32>
    %51 = vector.multi_reduction <add>, %50, %cst_30 [0] : vector<2x8x128xf32> to vector<8x128xf32>
    %52 = arith.addf %49, %51 : vector<8x128xf32>
    %c3_31 = arith.constant 3 : index
    %c0_32 = arith.constant 0 : index
    %c0_33 = arith.constant 0 : index
    %53 = vector.load %arg3[%c3_31, %c0_32, %c0_33] : memref<4x8x128xf32, #tpu.memory_space<vmem>>, vector<1x8x128xf32>
    %54 = vector.shape_cast %53 : vector<1x8x128xf32> to vector<8x128xf32>
    %55 = vector.shape_cast %52 : vector<8x128xf32> to vector<1x8x128xf32>
    tpu.vector_store %arg3[%c3_31, %c0_32, %c0_33], %55 {strides = array<i32>} : memref<4x8x128xf32, #tpu.memory_space<vmem>>, vector<1x8x128xf32>,
    return
  }
  func.func @transform_0(%arg0: i32) -> (i32, i32) {
    %c0_i32 = arith.constant 0 : i32
    %c0_i32_0 = arith.constant 0 : i32
    return %arg0, %c0_i32 : i32, i32
  }
  func.func @transform_1(%arg0: i32) -> (i32, i32) {
    %c0_i32 = arith.constant 0 : i32
    %c0_i32_0 = arith.constant 0 : i32
    return %arg0, %c0_i32 : i32, i32
  }
  func.func @transform_2(%arg0: i32) -> (i32, i32, i32) {
    %c0_i32 = arith.constant 0 : i32
    %c0_i32_0 = arith.constant 0 : i32
    %c0_i32_1 = arith.constant 0 : i32
    %c0_i32_2 = arith.constant 0 : i32
    return %c0_i32, %c0_i32_0, %c0_i32_1 : i32, i32, i32
  }
}

</mosaic_0001>

<llo_original>
// kernel: tpu_custom_call.1
$region0: #{tpu_custom_call.1}
  #allocation0 [shape = 'u32[]', space=smem, size = 0x4, offset = 0x4, fixed_abs, tag = 'smem constant byte address 0x4 - core index']
  #allocation1 [shape = 'u32[144,128]{1,0:T(1,128)}', space=vmem, size = 0x12000, scoped, tag = 'internal scratch']
  %s0 = inlined_call_operand.hbm [shape: f32[16,128], index: 0, kind: input, shape index: {}]
  %s1 = inlined_call_operand.hbm [shape: f32[16,128], index: 1, kind: input, shape index: {}]
  %s2 = inlined_call_operand.hbm [shape: f32[4,8,128], index: 2, kind: output, shape index: {}]
  %s3 = sld [smem:[#allocation0]]
  $region30: #{tpu_custom_call.1} parent=0
    _
  %s5 = ssub.s32 1, %s3
  %s6 = scalar_select 0, %s5, %s3
  $region1: #{tpu_custom_call.1} parent=0
    #allocation2 [shape = 'u8[8192]{0}', space=vmem, size = 0x2000, scoped, tag = 'input window, operand 0, single buffered']
    #allocation3 [shape = 's32[1]{0}', space=sflag, size = 0x4, scoped, tag = 'scoped memory for tpu_custom_call.1']
    #allocation4 [shape = 's32[1]{0}', space=sflag, size = 0x4, scoped, tag = 'scoped memory for tpu_custom_call.1']
    #allocation5 [shape = 'u8[8192]{0}', space=vmem, size = 0x2000, scoped, tag = 'input window, operand 1, single buffered']
    #allocation6 [shape = 's32[1]{0}', space=sflag, size = 0x4, scoped, tag = 'scoped memory for tpu_custom_call.1']
    #allocation7 [shape = 'u8[16384]{0}', space=vmem, size = 0x4000, scoped, tag = 'output window, operand 0, single buffered']
    %7 = vsyncpa [#allocation3], 0
    %8 = vsyncpa [#allocation6], 0
    %9 = vsyncpa [#allocation4], 0
    // Predicated region
    $region2: #{tpu_custom_call.1} parent=1 // pred_check
      _
    $region3: #{tpu_custom_call.1} parent=1 // pred_check_branch
      %11 = sbr.rel (0) target = $region5
    $region4: #{tpu_custom_call.1} parent=1 // pred_region
      %s13 = ssub.s32 256, 256
      %14 = vsyncadd [#allocation3], %s13
      %s15 = sshll.u32 [#allocation2], 4
      %s16 = int_to_ptr.vmem [resolvable:$true] %s15
      %21 = dma.hbm_to_vmem [thread:$0]  %s0, 256, %s16, [#allocation3], 128, 128, 8
    $region5: #{tpu_custom_call.1} parent=1 // pred_fallthru
      _
    // Predicated region
    $region6: #{tpu_custom_call.1} parent=1 // pred_check
      _
    $region7: #{tpu_custom_call.1} parent=1 // pred_check_branch
      %23 = sbr.rel (0) target = $region9
    $region8: #{tpu_custom_call.1} parent=1 // pred_region
      %s25 = ssub.s32 256, 256
      %26 = vsyncadd [#allocation6], %s25
      %s27 = sshll.u32 [#allocation5], 4
      %s28 = int_to_ptr.vmem [resolvable:$true] %s27
      %33 = dma.hbm_to_vmem [thread:$0]  %s1, 256, %s28, [#allocation6], 128, 128, 8
    $region9: #{tpu_custom_call.1} parent=1 // pred_fallthru
      _
    // Predicated region
    $region10: #{tpu_custom_call.1} parent=1 // pred_check
      _
    $region11: #{tpu_custom_call.1} parent=1 // pred_check_branch
      %35 = sbr.rel (0) target = $region13
    $region12: #{tpu_custom_call.1} parent=1 // pred_region
      %36 = dma.done [#allocation3], 256
    $region13: #{tpu_custom_call.1} parent=1 // pred_fallthru
      _
    // Predicated region
    $region14: #{tpu_custom_call.1} parent=1 // pred_check
      _
    $region15: #{tpu_custom_call.1} parent=1 // pred_check_branch
      %38 = sbr.rel (0) target = $region17
    $region16: #{tpu_custom_call.1} parent=1 // pred_region
      %39 = dma.done [#allocation6], 256
    $region17: #{tpu_custom_call.1} parent=1 // pred_fallthru
      _
    %p40 = scmp.eq.s32.totalorder 0, 0
    // Predicated region
    $region18: #{tpu_custom_call.1} parent=1 // pred_check
      %p41 = pneg %p40
    $region19: #{tpu_custom_call.1} parent=1 // pred_check_branch
      %43 = sbr.rel (%p41) target = $region21
    $region20: #{tpu_custom_call.1} parent=1 // pred_region
      %44 = vst [vmem:[#allocation7] sm:$0xff] 0.0
      %45 = vst [vmem:[#allocation7 + $0x8] sm:$0xff] 0.0
      %46 = vst [vmem:[#allocation7 + $0x10] sm:$0xff] 0.0
      %47 = vst [vmem:[#allocation7 + $0x18] sm:$0xff] 0.0
    $region21: #{tpu_custom_call.1} parent=1 // pred_fallthru
      _
    %v48 = vld [vmem:[#allocation2] sm:$0xff]
    %v49 = vld [vmem:[#allocation2 + $0x8] sm:$0xff]
    %v50 = vld [vmem:[#allocation5] sm:$0xff]
    %v51 = vld [vmem:[#allocation5 + $0x8] sm:$0xff]
    %v52 = vmul.f32 %v48, 0.5
    %v53 = vmul.f32 %v49, 0.5
    %v54 = vtanh.pop %v52
    %v55 = vtanh.pop %v53
    %v56 = vmul.f32 %v54, 0.5
    %v57 = vmul.f32 %v55, 0.5
    %v58 = vadd.f32 %v56, 0.5
    %v59 = vadd.f32 %v57, 0.5
    %vm60 = vcmp.ge.f32.partialorder %v48, 0.0
    %vm61 = vcmp.ge.f32.partialorder %v49, 0.0
    %v62 = vsub.f32 1.0, %v58
    %v63 = vsub.f32 1.0, %v59
    %v64 = vsel %vm60, %v58, %v62
    %v65 = vsel %vm61, %v59, %v63
    %v66 = vmax.f32 %v48, 0.0
    %v67 = vmax.f32 %v49, 0.0
    %v68 = vmul.f32 %v48, %v50
    %v69 = vmul.f32 %v49, %v51
    %v70 = vsub.f32 %v66, %v68
    %v71 = vsub.f32 %v67, %v69
    %v72 = vlog2.pop %v64
    %v73 = vmul.f32 %v72, 0.6931472
    %v74 = vlog2.pop %v65
    %v75 = vmul.f32 %v74, 0.6931472
    %v76 = vsub.f32 %v70, %v73
    %v77 = vsub.f32 %v71, %v75
    %v78 = vld [vmem:[#allocation7] sm:$0xff]
    %v79 = vmul.f32 %v58, %v50
    %v80 = vmul.f32 %v59, %v51
    %v81 = vadd.f32 %v79, %v80
    %v82 = vadd.f32 %v78, %v81
    %83 = vst [vmem:[#allocation7] sm:$0xff] %v82
    %s84 = scalar_lea.vmem [#allocation7], 8
    %v85 = vld [vmem:[%s84] sm:$0xff]
    %v86 = vadd.f32 %v58, %v59
    %v87 = vadd.f32 %v85, %v86
    %88 = vst [vmem:[%s84] sm:$0xff] %v87
    %s89 = scalar_lea.vmem [#allocation7], 16
    %v90 = vld [vmem:[%s89] sm:$0xff]
    %v91 = vadd.f32 %v50, %v51
    %v92 = vadd.f32 %v90, %v91
    %93 = vst [vmem:[%s89] sm:$0xff] %v92
    %s94 = scalar_lea.vmem [#allocation7], 24
    %v95 = vld [vmem:[%s94] sm:$0xff]
    %v96 = vadd.f32 %v76, %v77
    %v97 = vadd.f32 %v95, %v96
    %98 = vst [vmem:[%s94] sm:$0xff] %v97
    // Predicated region
    $region22: #{tpu_custom_call.1} parent=1 // pred_check
      _
    $region23: #{tpu_custom_call.1} parent=1 // pred_check_branch
      %100 = sbr.rel (0) target = $region25
    $region24: #{tpu_custom_call.1} parent=1 // pred_region
      %s102 = ssub.s32 512, 512
      %103 = vsyncadd [#allocation4], %s102
      %s104 = sshll.u32 [#allocation7], 4
      %s105 = int_to_ptr.vmem [resolvable:$true] %s104
      %110 = dma.vmem_to_hbm [thread:$0]  %s105, 512, %s2, [#allocation4], 128, 128, 8
    $region25: #{tpu_custom_call.1} parent=1 // pred_fallthru
      _
    // Predicated region
    $region26: #{tpu_custom_call.1} parent=1 // pred_check
      _
    $region27: #{tpu_custom_call.1} parent=1 // pred_check_branch
      %112 = sbr.rel (0) target = $region29
    $region28: #{tpu_custom_call.1} parent=1 // pred_region
      %113 = dma.done [#allocation4], 512
    $region29: #{tpu_custom_call.1} parent=1 // pred_fallthru
      _
    %114 = vsyncpa [#allocation3], 1
    %115 = vsyncpa [#allocation6], 1
    %116 = vsyncpa [#allocation4], 1

</llo_original>
